<compile_context>
chip_gen: v5e
topology: v5e:2x2
jax: 0.10.0
libtpu: 0.0.40
codegen_flags: <defaults>
</compile_context>

<pallas_src>
import jax
import jax.numpy as jnp
import numpy as np
from jax.experimental import pallas as pl
from jax.experimental.pallas import tpu as pltpu


_F_TILE_THRESHOLD = 1024   # above this feature width, tile the contraction axis
_F_TILE = 512


def _round_up(x: int, n: int) -> int:
    return (x + n - 1) // n * n


def _select_tile(m: int) -> tuple[int, int]:
    """Pick TM (=TN) among {512, 256, 128} minimizing padded_area / roofline_eff."""
    eff = {512: 0.85, 256: 0.63, 128: 0.29}   # measured HBM-roofline fractions
    best_t, best_pad, best_cost = None, None, None
    for t in (512, 256, 128):                 # ties go to the larger tile
        m_pad = _round_up(m, t)
        cost = (m_pad * m_pad) / eff[t]
        if best_cost is None or cost < best_cost:
            best_t, best_pad, best_cost = t, m_pad, cost
    return best_t, best_pad


def _gaussian_tile_kernel(scale_ref, xr_ref, xc_ref, rn_row_ref, rn_col_ref,
                          out_ref, acc_ref):
    """One (TM, TN) output tile, streamed over the F (contraction) axis.

    d = ||xi||^2 + ||xj||^2 - 2 <xi, xj>;   K = exp(d * scale).
    """
    k = pl.program_id(2)
    nk = pl.num_programs(2)

    @pl.when(k == 0)
    def _init():
        acc_ref[...] = jnp.zeros_like(acc_ref)

    # MXU NT contraction: (TM, TK) . (TN, TK)^T -> f32 (TM, TN). Operands stay
    # in their input dtype (bf16 gets full MXU rate); accumulation is f32.
    acc_ref[...] += jax.lax.dot_general(
        xr_ref[...], xc_ref[...],
        dimension_numbers=(((1,), (1,)), ((), ())),
        preferred_element_type=jnp.float32)

    last = k == nk - 1
    diag = pl.program_id(0) == pl.program_id(1)

    @pl.when(last)
    def _epilogue():
        d = rn_row_ref[...] + rn_col_ref[...] - 2.0 * acc_ref[...]   # (TM,1)+(1,TN)
        d = jnp.maximum(d, 0.0)                                       # exact math >= 0
        # Hoisted scale: exp(d * (-1/(2 sigma^2))) — EUP exp + one broadcast mul.
        out_ref[...] = jnp.exp(d * scale_ref[0]).astype(out_ref.dtype)

    # Grid-diagonal tiles only (1/grid_i of all tiles): force the exact-zero
    # diagonal with LOCAL iotas (tm == tn, so no global offsets needed).
    @pl.when(last & diag)
    def _fix_diag():
        tm, tn = out_ref.shape
        d = rn_row_ref[...] + rn_col_ref[...] - 2.0 * acc_ref[...]
        d = jnp.maximum(d, 0.0)
        row = jax.lax.broadcasted_iota(jnp.int32, (tm, tn), 0)
        col = jax.lax.broadcasted_iota(jnp.int32, (tm, tn), 1)
        d = jnp.where(row == col, 0.0, d)
        out_ref[...] = jnp.exp(d * scale_ref[0]).astype(out_ref.dtype)


def gaussian_kernel_matrix(x, sigma=None, track_running_stats=True, alpha=1.0,
                           mxu_dtype=None, out_dtype=jnp.float32):
    """JAX/Pallas equivalent of GaussianKernel.forward.

    x: (minibatch, F).
    mxu_dtype: optional dtype for the MXU operands (e.g. jnp.bfloat16 for a
      ~3-6x MXU win when F is large; trades small-distance fidelity).
    out_dtype: output dtype (bf16 halves HBM write traffic; opt-in —
      the PyTorch module returns f32).
    """
    assert track_running_stats or sigma is not None
    m, f = x.shape

    xf = x.astype(jnp.float32)
    row_sq = jnp.sum(xf * xf, axis=1)                         # (m,)  ||x_i||^2 in f32

    if track_running_stats:
        # mean_{i,j} ||x_i - x_j||^2 = 2 * ( mean_i ||x_i||^2 - ||mean_i x_i||^2 )
        mean_x = jnp.mean(xf, axis=0)
        mean_d = 2.0 * (jnp.mean(row_sq) - jnp.sum(mean_x * mean_x))
        sig_sq = jnp.float32(alpha) * mean_d
    else:
        sig_sq = jnp.float32(float(sigma) * float(sigma))

    scale = jnp.reshape((-0.5) / sig_sq, (1,)).astype(jnp.float32)   # -1/(2 sigma^2)

    # ---- tiling ---------------------------------------------------------
    tm, m_pad = _select_tile(m)
    tn = tm

    if f > _F_TILE_THRESHOLD:
        tk = _F_TILE
        f_pad = _round_up(f, tk)
    else:
        tk = f                 # single pass over the full (un-tiled) feature dim
        f_pad = f
    nk = f_pad // tk

    op_dtype = jnp.dtype(mxu_dtype) if mxu_dtype is not None else x.dtype

    pad_m = m_pad - m
    pad_f = f_pad - f
    # Zero-padded rows/features contribute 0 to the Gram tile and the norms.
    x_pad = jnp.pad(x, ((0, pad_m), (0, pad_f))).astype(op_dtype)   # (m_pad, f_pad)
    sq_pad = jnp.pad(row_sq, (0, pad_m))
    rn_row = jnp.reshape(sq_pad, (m_pad, 1))                        # (m_pad, 1) f32
    rn_col = jnp.reshape(sq_pad, (1, m_pad))                        # (1, m_pad) f32

    grid = (m_pad // tm, m_pad // tn, nk)

    # ---- VMEM budget (v5e scoped default is 16 MiB; v7x physical is 64 MiB)
    op_bytes = jnp.dtype(op_dtype).itemsize
    out_bytes = jnp.dtype(out_dtype).itemsize
    need = (2 * (tm * tk + tn * tk) * op_bytes     # double-buffered operand tiles
            + 2 * tm * tn * out_bytes              # double-buffered output tile
            + tm * tn * 4                          # f32 Gram accumulator (scratch)
            + 2 * (tm + tn) * 4)                   # norm tiles
    vmem_limit = int(min(max(2 * need + (8 << 20), 32 << 20), 64 << 20))

    out_pad = pl.pallas_call(
        _gaussian_tile_kernel,
        out_shape=jax.ShapeDtypeStruct((m_pad, m_pad), out_dtype),
        grid=grid,
        in_specs=[
            pl.BlockSpec(memory_space=pltpu.MemorySpace.SMEM),          # scale (SMEM)
            pl.BlockSpec((tm, tk), lambda i, j, k: (i, k)),             # X row tile
            pl.BlockSpec((tn, tk), lambda i, j, k: (j, k)),             # X col tile (same array)
            pl.BlockSpec((tm, 1), lambda i, j, k: (i, 0)),              # row norms (TM,1)
            pl.BlockSpec((1, tn), lambda i, j, k: (0, j)),              # col norms (1,TN)
        ],
        out_specs=pl.BlockSpec((tm, tn), lambda i, j, k: (i, j)),
        scratch_shapes=[pltpu.VMEM((tm, tn), jnp.float32)],             # Gram accumulator
        compiler_params=pltpu.CompilerParams(
            dimension_semantics=("parallel", "parallel", "arbitrary"),
            vmem_limit_bytes=vmem_limit),
    )(scale, x_pad, x_pad, rn_row, rn_col)

    if pad_m:
        # NOTE: this slice is an extra m_pad^2-read / m^2-write copy; callers
        # that can consume the padded matrix should take out_pad directly.
        return out_pad[:m, :m]
    return out_pad


def _reference(x, sigma=None, track_running_stats=True, alpha=1.0):
    """Pure-JAX reference mirroring the PyTorch code literally."""
    x = x.astype(jnp.float32)
    diff = x[None, :, :] - x[:, None, :]
    d = jnp.sum(diff * diff, axis=2)
    if track_running_stats:
        sig_sq = alpha * jnp.mean(d)
    else:
        sig_sq = jnp.float32(float(sigma) ** 2)
    return jnp.exp(-d / (2.0 * sig_sq))


if __name__ == "__main__":
    key = jax.random.PRNGKey(0)

    # Small shape consistent with the module: X is (minibatch, F).
    minibatch, feat = 8, 32
    x = jax.random.normal(key, (minibatch, feat), dtype=jnp.float32)

    out = jax.block_until_ready(
        gaussian_kernel_matrix(x, sigma=None, track_running_stats=True, alpha=1.0))
    ref = jax.block_until_ready(_reference(x))
    np.testing.assert_allclose(np.asarray(out), np.asarray(ref), rtol=1e-4, atol=1e-5)

    # Fixed-sigma path.
    out_fixed = jax.block_until_ready(
        gaussian_kernel_matrix(x, sigma=2.0, track_running_stats=False))
    ref_fixed = jax.block_until_ready(
        _reference(x, sigma=2.0, track_running_stats=False))
    np.testing.assert_allclose(np.asarray(out_fixed), np.asarray(ref_fixed),
                               rtol=1e-4, atol=1e-5)

    # Multi-tile grid (m=640 -> 256-tiles, 3x3 grid, padded rows, gated diagonal).
    k2 = jax.random.PRNGKey(0)
    x_big = jax.random.normal(k2, (640, 64), dtype=jnp.float32)
    out_big = jax.block_until_ready(gaussian_kernel_matrix(x_big))
    ref_big = jax.block_until_ready(_reference(x_big))
    np.testing.assert_allclose(np.asarray(out_big), np.asarray(ref_big),
                               rtol=5e-4, atol=5e-5)

    # Feature-tiled (accumulator) path: F=1200 > 1024 -> tk=512, nk=3.
    k3 = jax.random.PRNGKey(0)
    x_wide = jax.random.normal(k3, (128, 1200), dtype=jnp.float32)
    out_wide = jax.block_until_ready(gaussian_kernel_matrix(x_wide))
    ref_wide = jax.block_until_ready(_reference(x_wide))
    np.testing.assert_allclose(np.asarray(out_wide), np.asarray(ref_wide),
                               rtol=5e-4, atol=5e-5)

    print("KERNEL_OK")
</pallas_src>

<mosaic_0001>
module attributes {stable_mosaic.version = 11 : i64} {
  func.func @_gaussian_tile_kernel(%arg0: i32, %arg1: i32, %arg2: i32, %arg3: memref<1xf32, #tpu.memory_space<smem>>, %arg4: memref<128x32xf32, #tpu.memory_space<vmem>>, %arg5: memref<128x32xf32, #tpu.memory_space<vmem>>, %arg6: memref<128x1xf32, #tpu.memory_space<vmem>>, %arg7: memref<1x128xf32, #tpu.memory_space<vmem>>, %arg8: memref<128x128xf32, #tpu.memory_space<vmem>>, %arg9: memref<128x128xf32, #tpu.memory_space<vmem>>) attributes {dimension_semantics = [#tpu.dimension_semantics<parallel>, #tpu.dimension_semantics<parallel>, #tpu.dimension_semantics<arbitrary>], iteration_bounds = array<i64: 1, 1, 1>, scalar_prefetch = 0 : i64, scratch_operands = 1 : i64, tpu.core_type = #tpu.core_type<tc>, window_params = [{transform_indices = @transform_0, window_bounds = array<i64: 1>}, {transform_indices = @transform_1, window_bounds = array<i64: 128, 32>}, {transform_indices = @transform_2, window_bounds = array<i64: 128, 32>}, {transform_indices = @transform_3, window_bounds = array<i64: 128, 1>}, {transform_indices = @transform_4, window_bounds = array<i64: 1, 128>}, {transform_indices = @transform_5, window_bounds = array<i64: 128, 128>}]} {
    %c0_i32 = arith.constant 0 : i32
    %0 = arith.cmpi eq, %arg2, %c0_i32 : i32
    %1 = arith.extui %0 : i1 to i32
    %c0_i32_0 = arith.constant 0 : i32
    %2 = arith.cmpi ne, %1, %c0_i32_0 : i32
    scf.if %2 {
      %cst_11 = arith.constant 0.000000e+00 : f32
      %16 = vector.broadcast %cst_11 : f32 to vector<128x128xf32>
      %c0_12 = arith.constant 0 : index
      %c0_13 = arith.constant 0 : index
      %17 = vector.load %arg9[%c0_12, %c0_13] : memref<128x128xf32, #tpu.memory_space<vmem>>, vector<128x128xf32>
      tpu.vector_store %arg9[%c0_12, %c0_13], %16 {strides = array<i32>} : memref<128x128xf32, #tpu.memory_space<vmem>>, vector<128x128xf32>,
    } else {
    }
    %c0 = arith.constant 0 : index
    %c0_1 = arith.constant 0 : index
    %3 = vector.load %arg9[%c0, %c0_1] : memref<128x128xf32, #tpu.memory_space<vmem>>, vector<128x128xf32>
    %c0_2 = arith.constant 0 : index
    %c0_3 = arith.constant 0 : index
    %4 = vector.load %arg4[%c0_2, %c0_3] : memref<128x32xf32, #tpu.memory_space<vmem>>, vector<128x32xf32>
    %c0_4 = arith.constant 0 : index
    %c0_5 = arith.constant 0 : index
    %5 = vector.load %arg5[%c0_4, %c0_5] : memref<128x32xf32, #tpu.memory_space<vmem>>, vector<128x32xf32>
    %cst = arith.constant dense<0.000000e+00> : vector<128x128xf32>
    %6 = tpu.matmul %4, %5, %cst {dimension_numbers = #tpu.dot_dimension_numbers<[1], [1], [0], [0], [0, 0, 1, 0], [], []>} : vector<128x32xf32>, vector<128x32xf32>, vector<128x128xf32> -> vector<128x128xf32>
    %7 = arith.addf %3, %6 : vector<128x128xf32>
    %c0_6 = arith.constant 0 : index
    %c0_7 = arith.constant 0 : index
    %8 = vector.load %arg9[%c0_6, %c0_7] : memref<128x128xf32, #tpu.memory_space<vmem>>, vector<128x128xf32>
    tpu.vector_store %arg9[%c0_6, %c0_7], %7 {strides = array<i32>} : memref<128x128xf32, #tpu.memory_space<vmem>>, vector<128x128xf32>,
    %c0_i32_8 = arith.constant 0 : i32
    %9 = arith.cmpi eq, %arg2, %c0_i32_8 : i32
    %10 = arith.cmpi eq, %arg0, %arg1 : i32
    %11 = arith.extui %9 : i1 to i32
    %c0_i32_9 = arith.constant 0 : i32
    %12 = arith.cmpi ne, %11, %c0_i32_9 : i32
    scf.if %12 {
      %c0_11 = arith.constant 0 : index
      %c0_12 = arith.constant 0 : index
      %16 = vector.load %arg6[%c0_11, %c0_12] : memref<128x1xf32, #tpu.memory_space<vmem>>, vector<128x1xf32>
      %c0_13 = arith.constant 0 : index
      %c0_14 = arith.constant 0 : index
      %17 = vector.load %arg7[%c0_13, %c0_14] : memref<1x128xf32, #tpu.memory_space<vmem>>, vector<1x128xf32>
      %18 = vector.broadcast %16 : vector<128x1xf32> to vector<128x128xf32>
      %19 = vector.broadcast %17 : vector<1x128xf32> to vector<128x128xf32>
      %20 = arith.addf %18, %19 : vector<128x128xf32>
      %c0_15 = arith.constant 0 : index
      %c0_16 = arith.constant 0 : index
      %21 = vector.load %arg9[%c0_15, %c0_16] : memref<128x128xf32, #tpu.memory_space<vmem>>, vector<128x128xf32>
      %cst_17 = arith.constant 2.000000e+00 : f32
      %22 = vector.broadcast %cst_17 : f32 to vector<128x128xf32>
      %23 = arith.mulf %22, %21 : vector<128x128xf32>
      %24 = arith.subf %20, %23 : vector<128x128xf32>
      %cst_18 = arith.constant 0.000000e+00 : f32
      %25 = vector.broadcast %cst_18 : f32 to vector<128x128xf32>
      %26 = arith.maximumf %24, %25 : vector<128x128xf32>
      %c0_19 = arith.constant 0 : index
      %27 = memref.load %arg3[%c0_19] : memref<1xf32, #tpu.memory_space<smem>>
      %28 = vector.broadcast %27 : f32 to vector<128x128xf32>
      %29 = arith.mulf %26, %28 : vector<128x128xf32>
      %30 = math.exp %29 : vector<128x128xf32>
      %c0_20 = arith.constant 0 : index
      %c0_21 = arith.constant 0 : index
      %31 = vector.load %arg8[%c0_20, %c0_21] : memref<128x128xf32, #tpu.memory_space<vmem>>, vector<128x128xf32>
      tpu.vector_store %arg8[%c0_20, %c0_21], %30 {strides = array<i32>} : memref<128x128xf32, #tpu.memory_space<vmem>>, vector<128x128xf32>,
    } else {
    }
    %13 = arith.andi %9, %10 : i1
    %14 = arith.extui %13 : i1 to i32
    %c0_i32_10 = arith.constant 0 : i32
    %15 = arith.cmpi ne, %14, %c0_i32_10 : i32
    scf.if %15 {
      %c0_11 = arith.constant 0 : index
      %c0_12 = arith.constant 0 : index
      %16 = vector.load %arg6[%c0_11, %c0_12] : memref<128x1xf32, #tpu.memory_space<vmem>>, vector<128x1xf32>
      %c0_13 = arith.constant 0 : index
      %c0_14 = arith.constant 0 : index
      %17 = vector.load %arg7[%c0_13, %c0_14] : memref<1x128xf32, #tpu.memory_space<vmem>>, vector<1x128xf32>
      %18 = vector.broadcast %16 : vector<128x1xf32> to vector<128x128xf32>
      %19 = vector.broadcast %17 : vector<1x128xf32> to vector<128x128xf32>
      %20 = arith.addf %18, %19 : vector<128x128xf32>
      %c0_15 = arith.constant 0 : index
      %c0_16 = arith.constant 0 : index
      %21 = vector.load %arg9[%c0_15, %c0_16] : memref<128x128xf32, #tpu.memory_space<vmem>>, vector<128x128xf32>
      %cst_17 = arith.constant 2.000000e+00 : f32
      %22 = vector.broadcast %cst_17 : f32 to vector<128x128xf32>
      %23 = arith.mulf %22, %21 : vector<128x128xf32>
      %24 = arith.subf %20, %23 : vector<128x128xf32>
      %cst_18 = arith.constant 0.000000e+00 : f32
      %25 = vector.broadcast %cst_18 : f32 to vector<128x128xf32>
      %26 = arith.maximumf %24, %25 : vector<128x128xf32>
      %27 = tpu.iota {dimensions = array<i32: 0>} : vector<128x128xi32>
      %28 = tpu.iota {dimensions = array<i32: 1>} : vector<128x128xi32>
      %29 = arith.cmpi eq, %27, %28 : vector<128x128xi32>
      %cst_19 = arith.constant 0.000000e+00 : f32
      %30 = vector.broadcast %cst_19 : f32 to vector<128x128xf32>
      %31 = arith.select %29, %30, %26 : vector<128x128xi1>, vector<128x128xf32>
      %c0_20 = arith.constant 0 : index
      %32 = memref.load %arg3[%c0_20] : memref<1xf32, #tpu.memory_space<smem>>
      %33 = vector.broadcast %32 : f32 to vector<128x128xf32>
      %34 = arith.mulf %31, %33 : vector<128x128xf32>
      %35 = math.exp %34 : vector<128x128xf32>
      %c0_21 = arith.constant 0 : index
      %c0_22 = arith.constant 0 : index
      %36 = vector.load %arg8[%c0_21, %c0_22] : memref<128x128xf32, #tpu.memory_space<vmem>>, vector<128x128xf32>
      tpu.vector_store %arg8[%c0_21, %c0_22], %35 {strides = array<i32>} : memref<128x128xf32, #tpu.memory_space<vmem>>, vector<128x128xf32>,
    } else {
    }
    return
  }
  func.func @transform_0(%arg0: i32, %arg1: i32, %arg2: i32) -> i32 {
    %c0_i32 = arith.constant 0 : i32
    %c0_i32_0 = arith.constant 0 : i32
    return %c0_i32 : i32
  }
  func.func @transform_1(%arg0: i32, %arg1: i32, %arg2: i32) -> (i32, i32) {
    %c0_i32 = arith.constant 0 : i32
    return %arg0, %arg2 : i32, i32
  }
  func.func @transform_2(%arg0: i32, %arg1: i32, %arg2: i32) -> (i32, i32) {
    %c0_i32 = arith.constant 0 : i32
    return %arg1, %arg2 : i32, i32
  }
  func.func @transform_3(%arg0: i32, %arg1: i32, %arg2: i32) -> (i32, i32) {
    %c0_i32 = arith.constant 0 : i32
    %c0_i32_0 = arith.constant 0 : i32
    return %arg0, %c0_i32 : i32, i32
  }
  func.func @transform_4(%arg0: i32, %arg1: i32, %arg2: i32) -> (i32, i32) {
    %c0_i32 = arith.constant 0 : i32
    %c0_i32_0 = arith.constant 0 : i32
    return %c0_i32, %arg1 : i32, i32
  }
  func.func @transform_5(%arg0: i32, %arg1: i32, %arg2: i32) -> (i32, i32) {
    %c0_i32 = arith.constant 0 : i32
    return %arg0, %arg1 : i32, i32
  }
}

</mosaic_0001>

<llo_original>
// kernel: tpu_custom_call.1
$region0: #{tpu_custom_call.1}
  #allocation0 [shape = 'u32[]', space=smem, size = 0x4, offset = 0x4, fixed_abs, tag = 'smem constant byte address 0x4 - core index']
  #allocation1 [shape = 'u32[72,128]{1,0:T(1,128)}', space=vmem, size = 0x9000, scoped, tag = 'internal scratch']
  #allocation2 [shape = 'f32[128,128]{1,0:T(8,128)}', space=vmem, size = 0x10000, scoped, tag = 'scratch operand']
  #allocation3 [shape = 'f32[1]{0:T(128)S(6)}', space=smem, size = 0x200, scoped, tag = 'scoped memory for tpu_custom_call.1']
  %s0 = inlined_call_operand.<no memory space> [shape: f32[1], index: 0, kind: input, shape index: {}]
  %s1 = inlined_call_operand.vmem [shape: f32[128,32], index: 1, kind: input, shape index: {}]
  %s2 = inlined_call_operand.vmem [shape: f32[128,32], index: 2, kind: input, shape index: {}]
  %s3 = inlined_call_operand.vmem [shape: f32[128,1], index: 3, kind: input, shape index: {}]
  %s4 = inlined_call_operand.vmem [shape: f32[1,128], index: 4, kind: input, shape index: {}]
  %s5 = inlined_call_operand.hbm [shape: f32[128,128], index: 5, kind: output, shape index: {}]
  %s6 = sld [smem:[#allocation0]]
  $region42: #{tpu_custom_call.1} parent=0
    _
  %s8 = ssub.s32 1, %s6
  %s9 = scalar_select 0, %s8, %s6
  %10 = sst [smem:[#allocation3]] %s0
  $region1: #{tpu_custom_call.1} parent=0
    #allocation4 [shape = 'u8[65536]{0}', space=vmem, size = 0x10000, scoped, tag = 'output window, operand 0, single buffered']
    #allocation5 [shape = 's32[1]{0}', space=sflag, size = 0x4, scoped, tag = 'scoped memory for tpu_custom_call.1']
    %11 = vsyncpa [#allocation5], 0
    // Predicated region
    $region2: #{tpu_custom_call.1} parent=1 // pred_check
      _
    $region3: #{tpu_custom_call.1} parent=1 // pred_check_branch
      %13 = sbr.rel (0) target = $region5
    $region4: #{tpu_custom_call.1} parent=1 // pred_region
      _
    $region5: #{tpu_custom_call.1} parent=1 // pred_fallthru
      _
    // Predicated region
    $region6: #{tpu_custom_call.1} parent=1 // pred_check
      _
    $region7: #{tpu_custom_call.1} parent=1 // pred_check_branch
      %15 = sbr.rel (0) target = $region9
    $region8: #{tpu_custom_call.1} parent=1 // pred_region
      _
    $region9: #{tpu_custom_call.1} parent=1 // pred_fallthru
      _
    // Predicated region
    $region10: #{tpu_custom_call.1} parent=1 // pred_check
      _
    $region11: #{tpu_custom_call.1} parent=1 // pred_check_branch
      %17 = sbr.rel (0) target = $region13
    $region12: #{tpu_custom_call.1} parent=1 // pred_region
      _
    $region13: #{tpu_custom_call.1} parent=1 // pred_fallthru
      _
    // Predicated region
    $region14: #{tpu_custom_call.1} parent=1 // pred_check
      _
    $region15: #{tpu_custom_call.1} parent=1 // pred_check_branch
      %19 = sbr.rel (0) target = $region17
    $region16: #{tpu_custom_call.1} parent=1 // pred_region
      _
    $region17: #{tpu_custom_call.1} parent=1 // pred_fallthru
      _
    // Predicated region
    $region18: #{tpu_custom_call.1} parent=1 // pred_check
      _
    $region19: #{tpu_custom_call.1} parent=1 // pred_check_branch
      %21 = sbr.rel (0) target = $region21
    $region20: #{tpu_custom_call.1} parent=1 // pred_region
      _
    $region21: #{tpu_custom_call.1} parent=1 // pred_fallthru
      _
    %p22 = scmp.eq.s32.totalorder 0, 0
    // Predicated region
    $region22: #{tpu_custom_call.1} parent=1 // pred_check
      %p23 = pneg %p22
    $region23: #{tpu_custom_call.1} parent=1 // pred_check_branch
      %25 = sbr.rel (%p23) target = $region25
    $region24: #{tpu_custom_call.1} parent=1 // pred_region
      %26 = vst [vmem:[#allocation2] sm:$0xff] 0.0
      %27 = vst [vmem:[#allocation2 + $0x8] sm:$0xff] 0.0
      %28 = vst [vmem:[#allocation2 + $0x10] sm:$0xff] 0.0
      %29 = vst [vmem:[#allocation2 + $0x18] sm:$0xff] 0.0
      %30 = vst [vmem:[#allocation2 + $0x20] sm:$0xff] 0.0
      %31 = vst [vmem:[#allocation2 + $0x28] sm:$0xff] 0.0
      %32 = vst [vmem:[#allocation2 + $0x30] sm:$0xff] 0.0
      %33 = vst [vmem:[#allocation2 + $0x38] sm:$0xff] 0.0
      %34 = vst [vmem:[#allocation2 + $0x40] sm:$0xff] 0.0
      %35 = vst [vmem:[#allocation2 + $0x48] sm:$0xff] 0.0
      %36 = vst [vmem:[#allocation2 + $0x50] sm:$0xff] 0.0
      %37 = vst [vmem:[#allocation2 + $0x58] sm:$0xff] 0.0
      %38 = vst [vmem:[#allocation2 + $0x60] sm:$0xff] 0.0
      %39 = vst [vmem:[#allocation2 + $0x68] sm:$0xff] 0.0
      %40 = vst [vmem:[#allocation2 + $0x70] sm:$0xff] 0.0
      %41 = vst [vmem:[#allocation2 + $0x78] sm:$0xff] 0.0
    $region25: #{tpu_custom_call.1} parent=1 // pred_fallthru
      _
    %v42 = vld [vmem:[#allocation2] sm:$0xff]
    %v43 = vld [vmem:[#allocation2 + $0x8] sm:$0xff]
    %v44 = vld [vmem:[#allocation2 + $0x10] sm:$0xff]
    %v45 = vld [vmem:[#allocation2 + $0x18] sm:$0xff]
    %v46 = vld [vmem:[#allocation2 + $0x20] sm:$0xff]
    %v47 = vld [vmem:[#allocation2 + $0x28] sm:$0xff]
    %v48 = vld [vmem:[#allocation2 + $0x30] sm:$0xff]
    %v49 = vld [vmem:[#allocation2 + $0x38] sm:$0xff]
    %v50 = vld [vmem:[#allocation2 + $0x40] sm:$0xff]
    %v51 = vld [vmem:[#allocation2 + $0x48] sm:$0xff]
    %v52 = vld [vmem:[#allocation2 + $0x50] sm:$0xff]
    %v53 = vld [vmem:[#allocation2 + $0x58] sm:$0xff]
    %v54 = vld [vmem:[#allocation2 + $0x60] sm:$0xff]
    %v55 = vld [vmem:[#allocation2 + $0x68] sm:$0xff]
    %v56 = vld [vmem:[#allocation2 + $0x70] sm:$0xff]
    %v57 = vld [vmem:[#allocation2 + $0x78] sm:$0xff]
    %v58 = vld [vmem:[%s1] sm:$0xff]
    %v59 = vld [vmem:[%s1 + $0x8] sm:$0xff]
    %v60 = vld [vmem:[%s1 + $0x10] sm:$0xff]
    %v61 = vld [vmem:[%s1 + $0x18] sm:$0xff]
    %v62 = vld [vmem:[%s1 + $0x20] sm:$0xff]
    %v63 = vld [vmem:[%s1 + $0x28] sm:$0xff]
    %v64 = vld [vmem:[%s1 + $0x30] sm:$0xff]
    %v65 = vld [vmem:[%s1 + $0x38] sm:$0xff]
    %v66 = vld [vmem:[%s1 + $0x40] sm:$0xff]
    %v67 = vld [vmem:[%s1 + $0x48] sm:$0xff]
    %v68 = vld [vmem:[%s1 + $0x50] sm:$0xff]
    %v69 = vld [vmem:[%s1 + $0x58] sm:$0xff]
    %v70 = vld [vmem:[%s1 + $0x60] sm:$0xff]
    %v71 = vld [vmem:[%s1 + $0x68] sm:$0xff]
    %v72 = vld [vmem:[%s1 + $0x70] sm:$0xff]
    %v73 = vld [vmem:[%s1 + $0x78] sm:$0xff]
    %v74 = vld [vmem:[%s2] sm:$0xff]
    %v75 = vld [vmem:[%s2 + $0x8] sm:$0xff]
    %v76 = vld [vmem:[%s2 + $0x10] sm:$0xff]
    %v77 = vld [vmem:[%s2 + $0x18] sm:$0xff]
    %v78 = vld [vmem:[%s2 + $0x20] sm:$0xff]
    %v79 = vld [vmem:[%s2 + $0x28] sm:$0xff]
    %v80 = vld [vmem:[%s2 + $0x30] sm:$0xff]
    %v81 = vld [vmem:[%s2 + $0x38] sm:$0xff]
    %v82 = vld [vmem:[%s2 + $0x40] sm:$0xff]
    %v83 = vld [vmem:[%s2 + $0x48] sm:$0xff]
    %v84 = vld [vmem:[%s2 + $0x50] sm:$0xff]
    %v85 = vld [vmem:[%s2 + $0x58] sm:$0xff]
    %v86 = vld [vmem:[%s2 + $0x60] sm:$0xff]
    %v87 = vld [vmem:[%s2 + $0x68] sm:$0xff]
    %v88 = vld [vmem:[%s2 + $0x70] sm:$0xff]
    %v89 = vld [vmem:[%s2 + $0x78] sm:$0xff]
    %vm90 = vcmask 261120
    %v92 = vsel %vm90, %v58, 0
    %v95 = vsel %vm90, %v59, 0
    %v98 = vsel %vm90, %v60, 0
    %v101 = vsel %vm90, %v61, 0
    %v104 = vsel %vm90, %v62, 0
    %v107 = vsel %vm90, %v63, 0
    %v110 = vsel %vm90, %v64, 0
    %v113 = vsel %vm90, %v65, 0
    %v116 = vsel %vm90, %v66, 0
    %v119 = vsel %vm90, %v67, 0
    %v122 = vsel %vm90, %v68, 0
    %v125 = vsel %vm90, %v69, 0
    %v128 = vsel %vm90, %v70, 0
    %v131 = vsel %vm90, %v71, 0
    %v134 = vsel %vm90, %v72, 0
    %v137 = vsel %vm90, %v73, 0
    %v140 = vsel %vm90, %v74, 0
    %v143 = vsel %vm90, %v75, 0
    %v146 = vsel %vm90, %v76, 0
    %v149 = vsel %vm90, %v77, 0
    %v152 = vsel %vm90, %v78, 0
    %v155 = vsel %vm90, %v79, 0
    %v158 = vsel %vm90, %v80, 0
    %v161 = vsel %vm90, %v81, 0
    %v164 = vsel %vm90, %v82, 0
    %v167 = vsel %vm90, %v83, 0
    %v170 = vsel %vm90, %v84, 0
    %v173 = vsel %vm90, %v85, 0
    %v176 = vsel %vm90, %v86, 0
    %v179 = vsel %vm90, %v87, 0
    %v182 = vsel %vm90, %v88, 0
    %v185 = vsel %vm90, %v89, 0
    %187 = vmatpush.xpose.msra.mxu0 %v185
    %188 = vmatpush.xpose.msra.mxu0 %v182
    %189 = vmatpush.xpose.msra.mxu0 %v179
    %190 = vmatpush.xpose.msra.mxu0 %v176
    %191 = vmatpush.xpose.msra.mxu0 %v173
    %192 = vmatpush.xpose.msra.mxu0 %v170
    %193 = vmatpush.xpose.msra.mxu0 %v167
    %194 = vmatpush.xpose.msra.mxu0 %v164
    %195 = vmatpush.xpose.msra.mxu0 %v161
    %196 = vmatpush.xpose.msra.mxu0 %v158
    %197 = vmatpush.xpose.msra.mxu0 %v155
    %198 = vmatpush.xpose.msra.mxu0 %v152
    %199 = vmatpush.xpose.msra.mxu0 %v149
    %200 = vmatpush.xpose.msra.mxu0 %v146
    %201 = vmatpush.xpose.msra.mxu0 %v143
    %202 = vmatpush.xpose.msra.mxu0 %v140
    %203 = vmatmul.f32.gmra.mxu0 %v92
    %v204 = vpop.f32.mrf.mxu0
    %v205 = vadd.f32 0.0, %v204
    %206 = vmatmul.f32.gmra.mxu0 %v95
    %v207 = vpop.f32.mrf.mxu0
    %v208 = vadd.f32 0.0, %v207
    %209 = vmatmul.f32.gmra.mxu0 %v98
    %v210 = vpop.f32.mrf.mxu0
    %v211 = vadd.f32 0.0, %v210
    %212 = vmatmul.f32.gmra.mxu0 %v101
    %v213 = vpop.f32.mrf.mxu0
    %v214 = vadd.f32 0.0, %v213
    %215 = vmatmul.f32.gmra.mxu0 %v104
    %v216 = vpop.f32.mrf.mxu0
    %v217 = vadd.f32 0.0, %v216
    %218 = vmatmul.f32.gmra.mxu0 %v107
    %v219 = vpop.f32.mrf.mxu0
    %v220 = vadd.f32 0.0, %v219
    %221 = vmatmul.f32.gmra.mxu0 %v110
    %v222 = vpop.f32.mrf.mxu0
    %v223 = vadd.f32 0.0, %v222
    %224 = vmatmul.f32.gmra.mxu0 %v113
    %v225 = vpop.f32.mrf.mxu0
    %v226 = vadd.f32 0.0, %v225
    %227 = vmatmul.f32.gmra.mxu0 %v116
    %v228 = vpop.f32.mrf.mxu0
    %v229 = vadd.f32 0.0, %v228
    %230 = vmatmul.f32.gmra.mxu0 %v119
    %v231 = vpop.f32.mrf.mxu0
    %v232 = vadd.f32 0.0, %v231
    %233 = vmatmul.f32.gmra.mxu0 %v122
    %v234 = vpop.f32.mrf.mxu0
    %v235 = vadd.f32 0.0, %v234
    %236 = vmatmul.f32.gmra.mxu0 %v125
    %v237 = vpop.f32.mrf.mxu0
    %v238 = vadd.f32 0.0, %v237
    %239 = vmatmul.f32.gmra.mxu0 %v128
    %v240 = vpop.f32.mrf.mxu0
    %v241 = vadd.f32 0.0, %v240
    %242 = vmatmul.f32.gmra.mxu0 %v131
    %v243 = vpop.f32.mrf.mxu0
    %v244 = vadd.f32 0.0, %v243
    %245 = vmatmul.f32.gmra.mxu0 %v134
    %v246 = vpop.f32.mrf.mxu0
    %v247 = vadd.f32 0.0, %v246
    %248 = vmatmul.f32.gmra.mxu0 %v137
    %v249 = vpop.f32.mrf.mxu0
    %v250 = vadd.f32 0.0, %v249
    %251 = vdwg.mxu0
    %v252 = vadd.f32 %v42, %v205
    %v253 = vadd.f32 %v43, %v208
    %v254 = vadd.f32 %v44, %v211
    %v255 = vadd.f32 %v45, %v214
    %v256 = vadd.f32 %v46, %v217
    %v257 = vadd.f32 %v47, %v220
    %v258 = vadd.f32 %v48, %v223
    %v259 = vadd.f32 %v49, %v226
    %v260 = vadd.f32 %v50, %v229
    %v261 = vadd.f32 %v51, %v232
    %v262 = vadd.f32 %v52, %v235
    %v263 = vadd.f32 %v53, %v238
    %v264 = vadd.f32 %v54, %v241
    %v265 = vadd.f32 %v55, %v244
    %v266 = vadd.f32 %v56, %v247
    %v267 = vadd.f32 %v57, %v250
    %268 = vst [vmem:[#allocation2] sm:$0xff] %v252
    %269 = vst [vmem:[#allocation2 + $0x8] sm:$0xff] %v253
    %270 = vst [vmem:[#allocation2 + $0x10] sm:$0xff] %v254
    %271 = vst [vmem:[#allocation2 + $0x18] sm:$0xff] %v255
    %272 = vst [vmem:[#allocation2 + $0x20] sm:$0xff] %v256
    %273 = vst [vmem:[#allocation2 + $0x28] sm:$0xff] %v257
    %274 = vst [vmem:[#allocation2 + $0x30] sm:$0xff] %v258
    %275 = vst [vmem:[#allocation2 + $0x38] sm:$0xff] %v259
    %276 = vst [vmem:[#allocation2 + $0x40] sm:$0xff] %v260
    %277 = vst [vmem:[#allocation2 + $0x48] sm:$0xff] %v261
    %278 = vst [vmem:[#allocation2 + $0x50] sm:$0xff] %v262
    %279 = vst [vmem:[#allocation2 + $0x58] sm:$0xff] %v263
    %280 = vst [vmem:[#allocation2 + $0x60] sm:$0xff] %v264
    %281 = vst [vmem:[#allocation2 + $0x68] sm:$0xff] %v265
    %282 = vst [vmem:[#allocation2 + $0x70] sm:$0xff] %v266
    %283 = vst [vmem:[#allocation2 + $0x78] sm:$0xff] %v267
    %p284 = scmp.eq.s32.totalorder 0, 0
    // Predicated region
    $region26: #{tpu_custom_call.1} parent=1 // pred_check
      %p285 = pneg %p22
    $region27: #{tpu_custom_call.1} parent=1 // pred_check_branch
      %287 = sbr.rel (%p285) target = $region29
    $region28: #{tpu_custom_call.1} parent=1 // pred_region
      %v288 = vld [vmem:[%s3] sm:$0xff]
      %v289 = vld [vmem:[%s3 + $0x8] sm:$0xff]
      %v290 = vld [vmem:[%s3 + $0x10] sm:$0xff]
      %v291 = vld [vmem:[%s3 + $0x18] sm:$0xff]
      %v292 = vld [vmem:[%s3 + $0x20] sm:$0xff]
      %v293 = vld [vmem:[%s3 + $0x28] sm:$0xff]
      %v294 = vld [vmem:[%s3 + $0x30] sm:$0xff]
      %v295 = vld [vmem:[%s3 + $0x38] sm:$0xff]
      %v296 = vld [vmem:[%s3 + $0x40] sm:$0xff]
      %v297 = vld [vmem:[%s3 + $0x48] sm:$0xff]
      %v298 = vld [vmem:[%s3 + $0x50] sm:$0xff]
      %v299 = vld [vmem:[%s3 + $0x58] sm:$0xff]
      %v300 = vld [vmem:[%s3 + $0x60] sm:$0xff]
      %v301 = vld [vmem:[%s3 + $0x68] sm:$0xff]
      %v302 = vld [vmem:[%s3 + $0x70] sm:$0xff]
      %v303 = vld [vmem:[%s3 + $0x78] sm:$0xff]
      %v304 = vld [vmem:[%s4] sm:$0x1]
      %306 = vset.pattern.permute.xlu0 0
      %307 = vperm.xlu0 %306, %v288
      %v308 = vpop.permute.xlu0 %307
      %311 = vset.pattern.permute.xlu0 0
      %312 = vperm.xlu0 %311, %v289
      %v313 = vpop.permute.xlu0 %312
      %316 = vset.pattern.permute.xlu0 0
      %317 = vperm.xlu0 %316, %v290
      %v318 = vpop.permute.xlu0 %317
      %321 = vset.pattern.permute.xlu0 0
      %322 = vperm.xlu0 %321, %v291
      %v323 = vpop.permute.xlu0 %322
      %326 = vset.pattern.permute.xlu0 0
      %327 = vperm.xlu0 %326, %v292
      %v328 = vpop.permute.xlu0 %327
      %331 = vset.pattern.permute.xlu0 0
      %332 = vperm.xlu0 %331, %v293
      %v333 = vpop.permute.xlu0 %332
      %336 = vset.pattern.permute.xlu0 0
      %337 = vperm.xlu0 %336, %v294
      %v338 = vpop.permute.xlu0 %337
      %341 = vset.pattern.permute.xlu0 0
      %342 = vperm.xlu0 %341, %v295
      %v343 = vpop.permute.xlu0 %342
      %346 = vset.pattern.permute.xlu0 0
      %347 = vperm.xlu0 %346, %v296
      %v348 = vpop.permute.xlu0 %347
      %351 = vset.pattern.permute.xlu0 0
      %352 = vperm.xlu0 %351, %v297
      %v353 = vpop.permute.xlu0 %352
      %356 = vset.pattern.permute.xlu0 0
      %357 = vperm.xlu0 %356, %v298
      %v358 = vpop.permute.xlu0 %357
      %361 = vset.pattern.permute.xlu0 0
      %362 = vperm.xlu0 %361, %v299
      %v363 = vpop.permute.xlu0 %362
      %366 = vset.pattern.permute.xlu0 0
      %367 = vperm.xlu0 %366, %v300
      %v368 = vpop.permute.xlu0 %367
      %371 = vset.pattern.permute.xlu0 0
      %372 = vperm.xlu0 %371, %v301
      %v373 = vpop.permute.xlu0 %372
      %376 = vset.pattern.permute.xlu0 0
      %377 = vperm.xlu0 %376, %v302
      %v378 = vpop.permute.xlu0 %377
      %381 = vset.pattern.permute.xlu0 0
      %382 = vperm.xlu0 %381, %v303
      %v383 = vpop.permute.xlu0 %382
      %v386 = vperm.slane %v304, 0
      %v388 = vadd.f32 %v308, %v386
      %v389 = vadd.f32 %v313, %v386
      %v390 = vadd.f32 %v318, %v386
      %v391 = vadd.f32 %v323, %v386
      %v392 = vadd.f32 %v328, %v386
      %v393 = vadd.f32 %v333, %v386
      %v394 = vadd.f32 %v338, %v386
      %v395 = vadd.f32 %v343, %v386
      %v396 = vadd.f32 %v348, %v386
      %v397 = vadd.f32 %v353, %v386
      %v398 = vadd.f32 %v358, %v386
      %v399 = vadd.f32 %v363, %v386
      %v400 = vadd.f32 %v368, %v386
      %v401 = vadd.f32 %v373, %v386
      %v402 = vadd.f32 %v378, %v386
      %v403 = vadd.f32 %v383, %v386
      %v404 = vld [vmem:[#allocation2] sm:$0xff]
      %v405 = vld [vmem:[#allocation2 + $0x8] sm:$0xff]
      %v406 = vld [vmem:[#allocation2 + $0x10] sm:$0xff]
      %v407 = vld [vmem:[#allocation2 + $0x18] sm:$0xff]
      %v408 = vld [vmem:[#allocation2 + $0x20] sm:$0xff]
      %v409 = vld [vmem:[#allocation2 + $0x28] sm:$0xff]
      %v410 = vld [vmem:[#allocation2 + $0x30] sm:$0xff]
      %v411 = vld [vmem:[#allocation2 + $0x38] sm:$0xff]
      %v412 = vld [vmem:[#allocation2 + $0x40] sm:$0xff]
      %v413 = vld [vmem:[#allocation2 + $0x48] sm:$0xff]
      %v414 = vld [vmem:[#allocation2 + $0x50] sm:$0xff]
      %v415 = vld [vmem:[#allocation2 + $0x58] sm:$0xff]
      %v416 = vld [vmem:[#allocation2 + $0x60] sm:$0xff]
      %v417 = vld [vmem:[#allocation2 + $0x68] sm:$0xff]
      %v418 = vld [vmem:[#allocation2 + $0x70] sm:$0xff]
      %v419 = vld [vmem:[#allocation2 + $0x78] sm:$0xff]
      %v420 = vmul.f32 %v404, 2.0
      %v421 = vmul.f32 %v405, 2.0
      %v422 = vmul.f32 %v406, 2.0
      %v423 = vmul.f32 %v407, 2.0
      %v424 = vmul.f32 %v408, 2.0
      %v425 = vmul.f32 %v409, 2.0
      %v426 = vmul.f32 %v410, 2.0
      %v427 = vmul.f32 %v411, 2.0
      %v428 = vmul.f32 %v412, 2.0
      %v429 = vmul.f32 %v413, 2.0
      %v430 = vmul.f32 %v414, 2.0
      %v431 = vmul.f32 %v415, 2.0
      %v432 = vmul.f32 %v416, 2.0
      %v433 = vmul.f32 %v417, 2.0
      %v434 = vmul.f32 %v418, 2.0
      %v435 = vmul.f32 %v419, 2.0
      %v436 = vsub.f32 %v388, %v420
      %v437 = vsub.f32 %v389, %v421
      %v438 = vsub.f32 %v390, %v422
      %v439 = vsub.f32 %v391, %v423
      %v440 = vsub.f32 %v392, %v424
      %v441 = vsub.f32 %v393, %v425
      %v442 = vsub.f32 %v394, %v426
      %v443 = vsub.f32 %v395, %v427
      %v444 = vsub.f32 %v396, %v428
      %v445 = vsub.f32 %v397, %v429
      %v446 = vsub.f32 %v398, %v430
      %v447 = vsub.f32 %v399, %v431
      %v448 = vsub.f32 %v400, %v432
      %v449 = vsub.f32 %v401, %v433
      %v450 = vsub.f32 %v402, %v434
      %v451 = vsub.f32 %v403, %v435
      %v452 = vmax.f32 %v436, 0.0
      %v453 = vmax.f32 %v437, 0.0
      %v454 = vmax.f32 %v438, 0.0
      %v455 = vmax.f32 %v439, 0.0
      %v456 = vmax.f32 %v440, 0.0
      %v457 = vmax.f32 %v441, 0.0
      %v458 = vmax.f32 %v442, 0.0
      %v459 = vmax.f32 %v443, 0.0
      %v460 = vmax.f32 %v444, 0.0
      %v461 = vmax.f32 %v445, 0.0
      %v462 = vmax.f32 %v446, 0.0
      %v463 = vmax.f32 %v447, 0.0
      %v464 = vmax.f32 %v448, 0.0
      %v465 = vmax.f32 %v449, 0.0
      %v466 = vmax.f32 %v450, 0.0
      %v467 = vmax.f32 %v451, 0.0
      %s468 = sld [smem:[#allocation3]]
      %v469 = vstv %s468
      %v470 = vmul.f32 %v452, %v469
      %v471 = vmul.f32 %v453, %v469
      %v472 = vmul.f32 %v454, %v469
      %v473 = vmul.f32 %v455, %v469
      %v474 = vmul.f32 %v456, %v469
      %v475 = vmul.f32 %v457, %v469
      %v476 = vmul.f32 %v458, %v469
      %v477 = vmul.f32 %v459, %v469
      %v478 = vmul.f32 %v460, %v469
      %v479 = vmul.f32 %v461, %v469
      %v480 = vmul.f32 %v462, %v469
      %v481 = vmul.f32 %v463, %v469
      %v482 = vmul.f32 %v464, %v469
      %v483 = vmul.f32 %v465, %v469
      %v484 = vmul.f32 %v466, %v469
      %v485 = vmul.f32 %v467, %v469
      %v486 = vmul.f32 %v470, 1.442695
      %v487 = vpow.pop %v486
      %v488 = vmul.f32 %v471, 1.442695
      %v489 = vpow.pop %v488
      %v490 = vmul.f32 %v472, 1.442695
      %v491 = vpow.pop %v490
      %v492 = vmul.f32 %v473, 1.442695
      %v493 = vpow.pop %v492
      %v494 = vmul.f32 %v474, 1.442695
      %v495 = vpow.pop %v494
      %v496 = vmul.f32 %v475, 1.442695
      %v497 = vpow.pop %v496
      %v498 = vmul.f32 %v476, 1.442695
      %v499 = vpow.pop %v498
      %v500 = vmul.f32 %v477, 1.442695
      %v501 = vpow.pop %v500
      %v502 = vmul.f32 %v478, 1.442695
      %v503 = vpow.pop %v502
      %v504 = vmul.f32 %v479, 1.442695
      %v505 = vpow.pop %v504
      %v506 = vmul.f32 %v480, 1.442695
      %v507 = vpow.pop %v506
      %v508 = vmul.f32 %v481, 1.442695
      %v509 = vpow.pop %v508
      %v510 = vmul.f32 %v482, 1.442695
      %v511 = vpow.pop %v510
      %v512 = vmul.f32 %v483, 1.442695
      %v513 = vpow.pop %v512
      %v514 = vmul.f32 %v484, 1.442695
      %v515 = vpow.pop %v514
      %v516 = vmul.f32 %v485, 1.442695
      %v517 = vpow.pop %v516
      %518 = vst [vmem:[#allocation4] sm:$0xff] %v487
      %519 = vst [vmem:[#allocation4 + $0x8] sm:$0xff] %v489
      %520 = vst [vmem:[#allocation4 + $0x10] sm:$0xff] %v491
      %521 = vst [vmem:[#allocation4 + $0x18] sm:$0xff] %v493
      %522 = vst [vmem:[#allocation4 + $0x20] sm:$0xff] %v495
      %523 = vst [vmem:[#allocation4 + $0x28] sm:$0xff] %v497
      %524 = vst [vmem:[#allocation4 + $0x30] sm:$0xff] %v499
      %525 = vst [vmem:[#allocation4 + $0x38] sm:$0xff] %v501
      %526 = vst [vmem:[#allocation4 + $0x40] sm:$0xff] %v503
      %527 = vst [vmem:[#allocation4 + $0x48] sm:$0xff] %v505
      %528 = vst [vmem:[#allocation4 + $0x50] sm:$0xff] %v507
      %529 = vst [vmem:[#allocation4 + $0x58] sm:$0xff] %v509
      %530 = vst [vmem:[#allocation4 + $0x60] sm:$0xff] %v511
      %531 = vst [vmem:[#allocation4 + $0x68] sm:$0xff] %v513
      %532 = vst [vmem:[#allocation4 + $0x70] sm:$0xff] %v515
      %533 = vst [vmem:[#allocation4 + $0x78] sm:$0xff] %v517
    $region29: #{tpu_custom_call.1} parent=1 // pred_fallthru
      _
    %p534 = pnand %p22, %p284
    %p535 = pneg %p534
    // Predicated region
    $region30: #{tpu_custom_call.1} parent=1 // pred_check
      _
    $region31: #{tpu_custom_call.1} parent=1 // pred_check_branch
      %537 = sbr.rel (%p534) target = $region33
    $region32: #{tpu_custom_call.1} parent=1 // pred_region
      %v538 = vld [vmem:[%s3] sm:$0xff]
      %v539 = vld [vmem:[%s3 + $0x8] sm:$0xff]
      %v540 = vld [vmem:[%s3 + $0x10] sm:$0xff]
      %v541 = vld [vmem:[%s3 + $0x18] sm:$0xff]
      %v542 = vld [vmem:[%s3 + $0x20] sm:$0xff]
      %v543 = vld [vmem:[%s3 + $0x28] sm:$0xff]
      %v544 = vld [vmem:[%s3 + $0x30] sm:$0xff]
      %v545 = vld [vmem:[%s3 + $0x38] sm:$0xff]
      %v546 = vld [vmem:[%s3 + $0x40] sm:$0xff]
      %v547 = vld [vmem:[%s3 + $0x48] sm:$0xff]
      %v548 = vld [vmem:[%s3 + $0x50] sm:$0xff]
      %v549 = vld [vmem:[%s3 + $0x58] sm:$0xff]
      %v550 = vld [vmem:[%s3 + $0x60] sm:$0xff]
      %v551 = vld [vmem:[%s3 + $0x68] sm:$0xff]
      %v552 = vld [vmem:[%s3 + $0x70] sm:$0xff]
      %v553 = vld [vmem:[%s3 + $0x78] sm:$0xff]
      %v554 = vld [vmem:[%s4] sm:$0x1]
      %556 = vset.pattern.permute.xlu0 0
      %557 = vperm.xlu0 %556, %v538
      %v558 = vpop.permute.xlu0 %557
      %561 = vset.pattern.permute.xlu0 0
      %562 = vperm.xlu0 %561, %v539
      %v563 = vpop.permute.xlu0 %562
      %566 = vset.pattern.permute.xlu0 0
      %567 = vperm.xlu0 %566, %v540
      %v568 = vpop.permute.xlu0 %567
      %571 = vset.pattern.permute.xlu0 0
      %572 = vperm.xlu0 %571, %v541
      %v573 = vpop.permute.xlu0 %572
      %576 = vset.pattern.permute.xlu0 0
      %577 = vperm.xlu0 %576, %v542
      %v578 = vpop.permute.xlu0 %577
      %581 = vset.pattern.permute.xlu0 0
      %582 = vperm.xlu0 %581, %v543
      %v583 = vpop.permute.xlu0 %582
      %586 = vset.pattern.permute.xlu0 0
      %587 = vperm.xlu0 %586, %v544
      %v588 = vpop.permute.xlu0 %587
      %591 = vset.pattern.permute.xlu0 0
      %592 = vperm.xlu0 %591, %v545
      %v593 = vpop.permute.xlu0 %592
      %596 = vset.pattern.permute.xlu0 0
      %597 = vperm.xlu0 %596, %v546
      %v598 = vpop.permute.xlu0 %597
      %601 = vset.pattern.permute.xlu0 0
      %602 = vperm.xlu0 %601, %v547
      %v603 = vpop.permute.xlu0 %602
      %606 = vset.pattern.permute.xlu0 0
      %607 = vperm.xlu0 %606, %v548
      %v608 = vpop.permute.xlu0 %607
      %611 = vset.pattern.permute.xlu0 0
      %612 = vperm.xlu0 %611, %v549
      %v613 = vpop.permute.xlu0 %612
      %616 = vset.pattern.permute.xlu0 0
      %617 = vperm.xlu0 %616, %v550
      %v618 = vpop.permute.xlu0 %617
      %621 = vset.pattern.permute.xlu0 0
      %622 = vperm.xlu0 %621, %v551
      %v623 = vpop.permute.xlu0 %622
      %626 = vset.pattern.permute.xlu0 0
      %627 = vperm.xlu0 %626, %v552
      %v628 = vpop.permute.xlu0 %627
      %631 = vset.pattern.permute.xlu0 0
      %632 = vperm.xlu0 %631, %v553
      %v633 = vpop.permute.xlu0 %632
      %v636 = vperm.slane %v554, 0
      %v638 = vadd.f32 %v558, %v636
      %v639 = vadd.f32 %v563, %v636
      %v640 = vadd.f32 %v568, %v636
      %v641 = vadd.f32 %v573, %v636
      %v642 = vadd.f32 %v578, %v636
      %v643 = vadd.f32 %v583, %v636
      %v644 = vadd.f32 %v588, %v636
      %v645 = vadd.f32 %v593, %v636
      %v646 = vadd.f32 %v598, %v636
      %v647 = vadd.f32 %v603, %v636
      %v648 = vadd.f32 %v608, %v636
      %v649 = vadd.f32 %v613, %v636
      %v650 = vadd.f32 %v618, %v636
      %v651 = vadd.f32 %v623, %v636
      %v652 = vadd.f32 %v628, %v636
      %v653 = vadd.f32 %v633, %v636
      %v654 = vld [vmem:[#allocation2] sm:$0xff]
      %v655 = vld [vmem:[#allocation2 + $0x8] sm:$0xff]
      %v656 = vld [vmem:[#allocation2 + $0x10] sm:$0xff]
      %v657 = vld [vmem:[#allocation2 + $0x18] sm:$0xff]
      %v658 = vld [vmem:[#allocation2 + $0x20] sm:$0xff]
      %v659 = vld [vmem:[#allocation2 + $0x28] sm:$0xff]
      %v660 = vld [vmem:[#allocation2 + $0x30] sm:$0xff]
      %v661 = vld [vmem:[#allocation2 + $0x38] sm:$0xff]
      %v662 = vld [vmem:[#allocation2 + $0x40] sm:$0xff]
      %v663 = vld [vmem:[#allocation2 + $0x48] sm:$0xff]
      %v664 = vld [vmem:[#allocation2 + $0x50] sm:$0xff]
      %v665 = vld [vmem:[#allocation2 + $0x58] sm:$0xff]
      %v666 = vld [vmem:[#allocation2 + $0x60] sm:$0xff]
      %v667 = vld [vmem:[#allocation2 + $0x68] sm:$0xff]
      %v668 = vld [vmem:[#allocation2 + $0x70] sm:$0xff]
      %v669 = vld [vmem:[#allocation2 + $0x78] sm:$0xff]
      %v670 = vmul.f32 %v654, 2.0
      %v671 = vmul.f32 %v655, 2.0
      %v672 = vmul.f32 %v656, 2.0
      %v673 = vmul.f32 %v657, 2.0
      %v674 = vmul.f32 %v658, 2.0
      %v675 = vmul.f32 %v659, 2.0
      %v676 = vmul.f32 %v660, 2.0
      %v677 = vmul.f32 %v661, 2.0
      %v678 = vmul.f32 %v662, 2.0
      %v679 = vmul.f32 %v663, 2.0
      %v680 = vmul.f32 %v664, 2.0
      %v681 = vmul.f32 %v665, 2.0
      %v682 = vmul.f32 %v666, 2.0
      %v683 = vmul.f32 %v667, 2.0
      %v684 = vmul.f32 %v668, 2.0
      %v685 = vmul.f32 %v669, 2.0
      %v686 = vsub.f32 %v638, %v670
      %v687 = vsub.f32 %v639, %v671
      %v688 = vsub.f32 %v640, %v672
      %v689 = vsub.f32 %v641, %v673
      %v690 = vsub.f32 %v642, %v674
      %v691 = vsub.f32 %v643, %v675
      %v692 = vsub.f32 %v644, %v676
      %v693 = vsub.f32 %v645, %v677
      %v694 = vsub.f32 %v646, %v678
      %v695 = vsub.f32 %v647, %v679
      %v696 = vsub.f32 %v648, %v680
      %v697 = vsub.f32 %v649, %v681
      %v698 = vsub.f32 %v650, %v682
      %v699 = vsub.f32 %v651, %v683
      %v700 = vsub.f32 %v652, %v684
      %v701 = vsub.f32 %v653, %v685
      %v702 = vmax.f32 %v686, 0.0
      %v703 = vmax.f32 %v687, 0.0
      %v704 = vmax.f32 %v688, 0.0
      %v705 = vmax.f32 %v689, 0.0
      %v706 = vmax.f32 %v690, 0.0
      %v707 = vmax.f32 %v691, 0.0
      %v708 = vmax.f32 %v692, 0.0
      %v709 = vmax.f32 %v693, 0.0
      %v710 = vmax.f32 %v694, 0.0
      %v711 = vmax.f32 %v695, 0.0
      %v712 = vmax.f32 %v696, 0.0
      %v713 = vmax.f32 %v697, 0.0
      %v714 = vmax.f32 %v698, 0.0
      %v715 = vmax.f32 %v699, 0.0
      %v716 = vmax.f32 %v700, 0.0
      %v717 = vmax.f32 %v701, 0.0
      %v718 = vlaneseq
      %v719 = vshrl.u32 %v718, 7
      %v720 = vadd.s32 %v719, 8
      %v721 = vadd.s32 %v719, 16
      %v722 = vadd.s32 %v719, 24
      %v723 = vadd.s32 %v719, 32
      %v724 = vadd.s32 %v719, 40
      %v725 = vadd.s32 %v719, 48
      %v726 = vadd.s32 %v719, 56
      %v727 = vadd.s32 %v719, 64
      %v728 = vadd.s32 %v719, 72
      %v729 = vadd.s32 %v719, 80
      %v730 = vadd.s32 %v719, 88
      %v731 = vadd.s32 %v719, 96
      %v732 = vadd.s32 %v719, 104
      %v733 = vadd.s32 %v719, 112
      %v734 = vadd.s32 %v719, 120
      %v735 = vlaneseq
      %v736 = vand.u32 %v735, 127
      %vm737 = vcmp.eq.s32.totalorder %v719, %v736
      %vm738 = vcmp.eq.s32.totalorder %v720, %v736
      %vm739 = vcmp.eq.s32.totalorder %v721, %v736
      %vm740 = vcmp.eq.s32.totalorder %v722, %v736
      %vm741 = vcmp.eq.s32.totalorder %v723, %v736
      %vm742 = vcmp.eq.s32.totalorder %v724, %v736
      %vm743 = vcmp.eq.s32.totalorder %v725, %v736
      %vm744 = vcmp.eq.s32.totalorder %v726, %v736
      %vm745 = vcmp.eq.s32.totalorder %v727, %v736
      %vm746 = vcmp.eq.s32.totalorder %v728, %v736
      %vm747 = vcmp.eq.s32.totalorder %v729, %v736
      %vm748 = vcmp.eq.s32.totalorder %v730, %v736
      %vm749 = vcmp.eq.s32.totalorder %v731, %v736
      %vm750 = vcmp.eq.s32.totalorder %v732, %v736
      %vm751 = vcmp.eq.s32.totalorder %v733, %v736
      %vm752 = vcmp.eq.s32.totalorder %v734, %v736
      %v753 = vsel %vm737, 0.0, %v702
      %v754 = vsel %vm738, 0.0, %v703
      %v755 = vsel %vm739, 0.0, %v704
      %v756 = vsel %vm740, 0.0, %v705
      %v757 = vsel %vm741, 0.0, %v706
      %v758 = vsel %vm742, 0.0, %v707
      %v759 = vsel %vm743, 0.0, %v708
      %v760 = vsel %vm744, 0.0, %v709
      %v761 = vsel %vm745, 0.0, %v710
      %v762 = vsel %vm746, 0.0, %v711
      %v763 = vsel %vm747, 0.0, %v712
      %v764 = vsel %vm748, 0.0, %v713
      %v765 = vsel %vm749, 0.0, %v714
      %v766 = vsel %vm750, 0.0, %v715
      %v767 = vsel %vm751, 0.0, %v716
      %v768 = vsel %vm752, 0.0, %v717
      %s769 = sld [smem:[#allocation3]]
      %v770 = vstv %s769
      %v771 = vmul.f32 %v753, %v770
      %v772 = vmul.f32 %v754, %v770
      %v773 = vmul.f32 %v755, %v770
      %v774 = vmul.f32 %v756, %v770
      %v775 = vmul.f32 %v757, %v770
      %v776 = vmul.f32 %v758, %v770
      %v777 = vmul.f32 %v759, %v770
      %v778 = vmul.f32 %v760, %v770
      %v779 = vmul.f32 %v761, %v770
      %v780 = vmul.f32 %v762, %v770
      %v781 = vmul.f32 %v763, %v770
      %v782 = vmul.f32 %v764, %v770
      %v783 = vmul.f32 %v765, %v770
      %v784 = vmul.f32 %v766, %v770
      %v785 = vmul.f32 %v767, %v770
      %v786 = vmul.f32 %v768, %v770
      %v787 = vmul.f32 %v771, 1.442695
      %v788 = vpow.pop %v787
      %v789 = vmul.f32 %v772, 1.442695
      %v790 = vpow.pop %v789
      %v791 = vmul.f32 %v773, 1.442695
      %v792 = vpow.pop %v791
      %v793 = vmul.f32 %v774, 1.442695
      %v794 = vpow.pop %v793
      %v795 = vmul.f32 %v775, 1.442695
      %v796 = vpow.pop %v795
      %v797 = vmul.f32 %v776, 1.442695
      %v798 = vpow.pop %v797
      %v799 = vmul.f32 %v777, 1.442695
      %v800 = vpow.pop %v799
      %v801 = vmul.f32 %v778, 1.442695
      %v802 = vpow.pop %v801
      %v803 = vmul.f32 %v779, 1.442695
      %v804 = vpow.pop %v803
      %v805 = vmul.f32 %v780, 1.442695
      %v806 = vpow.pop %v805
      %v807 = vmul.f32 %v781, 1.442695
      %v808 = vpow.pop %v807
      %v809 = vmul.f32 %v782, 1.442695
      %v810 = vpow.pop %v809
      %v811 = vmul.f32 %v783, 1.442695
      %v812 = vpow.pop %v811
      %v813 = vmul.f32 %v784, 1.442695
      %v814 = vpow.pop %v813
      %v815 = vmul.f32 %v785, 1.442695
      %v816 = vpow.pop %v815
      %v817 = vmul.f32 %v786, 1.442695
      %v818 = vpow.pop %v817
      %819 = vst [vmem:[#allocation4] sm:$0xff] %v788
      %820 = vst [vmem:[#allocation4 + $0x8] sm:$0xff] %v790
      %821 = vst [vmem:[#allocation4 + $0x10] sm:$0xff] %v792
      %822 = vst [vmem:[#allocation4 + $0x18] sm:$0xff] %v794
      %823 = vst [vmem:[#allocation4 + $0x20] sm:$0xff] %v796
      %824 = vst [vmem:[#allocation4 + $0x28] sm:$0xff] %v798
      %825 = vst [vmem:[#allocation4 + $0x30] sm:$0xff] %v800
      %826 = vst [vmem:[#allocation4 + $0x38] sm:$0xff] %v802
      %827 = vst [vmem:[#allocation4 + $0x40] sm:$0xff] %v804
      %828 = vst [vmem:[#allocation4 + $0x48] sm:$0xff] %v806
      %829 = vst [vmem:[#allocation4 + $0x50] sm:$0xff] %v808
      %830 = vst [vmem:[#allocation4 + $0x58] sm:$0xff] %v810
      %831 = vst [vmem:[#allocation4 + $0x60] sm:$0xff] %v812
      %832 = vst [vmem:[#allocation4 + $0x68] sm:$0xff] %v814
      %833 = vst [vmem:[#allocation4 + $0x70] sm:$0xff] %v816
      %834 = vst [vmem:[#allocation4 + $0x78] sm:$0xff] %v818
    $region33: #{tpu_custom_call.1} parent=1 // pred_fallthru
      _
    // Predicated region
    $region34: #{tpu_custom_call.1} parent=1 // pred_check
      _
    $region35: #{tpu_custom_call.1} parent=1 // pred_check_branch
      %836 = sbr.rel (0) target = $region37
    $region36: #{tpu_custom_call.1} parent=1 // pred_region
      %838 = vsyncadd [#allocation5], 0
      %s839 = sshll.u32 [#allocation4], 4
      %s840 = int_to_ptr.vmem [resolvable:$true] %s839
      %s841 = sshll.u32 %s5, 4
      %s842 = int_to_ptr.hbm [resolvable:$true] %s841
      %847 = dma.vmem_to_hbm [thread:$0]  %s840, 2048, %s842, [#allocation5], 128, 128, 8
    $region37: #{tpu_custom_call.1} parent=1 // pred_fallthru
      _
    // Predicated region
    $region38: #{tpu_custom_call.1} parent=1 // pred_check
      _
    $region39: #{tpu_custom_call.1} parent=1 // pred_check_branch
      %849 = sbr.rel (0) target = $region41
    $region40: #{tpu_custom_call.1} parent=1 // pred_region
      %851 = dma.done [#allocation5], 2048
    $region41: #{tpu_custom_call.1} parent=1 // pred_fallthru
      _
    %852 = vsyncpa [#allocation5], 1

</llo_original>
